<compile_context>
chip_gen: v5e
topology: v5e:2x2
jax: 0.10.0
libtpu: 0.0.40
codegen_flags: <defaults>
</compile_context>

<pallas_src>
import jax
import jax.numpy as jnp
from jax.experimental import pallas as pl
from jax.experimental.pallas import tpu as pltpu

_LANES = 128
_SUBLANE_BY_ITEMSIZE = {4: 8, 2: 16, 1: 32}


def _compute_dtype_for(x_dtype):
    """bf16 math on chips with bf16 VPU/EUP (v6e/v7x); f32 otherwise."""
    if jnp.dtype(x_dtype) != jnp.dtype(jnp.bfloat16):
        return jnp.float32
    try:
        kind = jax.devices()[0].device_kind.lower()
    except Exception:
        return jnp.float32
    if "v5" in kind:  # v5e: no bf16 VPU/EUP -> keep the f32 path
        return jnp.float32
    return jnp.bfloat16


def _choose_tile_b(B, D, itemsize, *, vmem_limit_bytes, sublane):
    """Rows per block: (in + out) streams, each up to triple-buffered, must fit
    in ~70% of the scoped VMEM limit (headroom for weight tile + scratch)."""
    bytes_per_row = D * itemsize
    budget = int(0.70 * vmem_limit_bytes)
    rows = budget // (2 * 3 * bytes_per_row)      # 2 streams x 3 buffers
    rows = max(sublane, (rows // sublane) * sublane)
    total_bytes = B * bytes_per_row
    if rows >= B:
        # Whole array fits one block. Only accept grid=(1,) for tiny arrays;
        # otherwise split into >=2 even-ish steps so both v7x TensorCores get
        # work and DMA overlaps compute.
        if total_bytes <= (1 << 20) or B < 2 * sublane:
            return B
        half = -(-B // 2)
        rows = -(-half // sublane) * sublane
    return min(rows, B)


def _stream_spec(tile_b, D, buffers):
    """BlockSpec for a streamed (batch-tiled) tensor, optionally deeper-pipelined."""
    index_map = lambda i: (i, 0)
    if buffers > 2:
        try:
            return pl.BlockSpec((tile_b, D), index_map,
                                pipeline_mode=pl.Buffered(buffers))
        except TypeError:
            pass  # older jax without pipeline_mode: default double-buffering
    return pl.BlockSpec((tile_b, D), index_map)


def _eddi_call(x2d, w2d, tile_b, *, compute_dtype, vmem_limit_bytes):
    B, D = x2d.shape
    itemsize = jnp.dtype(x2d.dtype).itemsize
    n_steps = -(-B // tile_b)
    # Deeper pipeline only pays when there are enough steps to hide DMA setup.
    buffers = 3 if n_steps >= 3 else 2

    def kernel(x_ref, w_ref, o_ref):
        x = x_ref[...].astype(compute_dtype)
        w = w_ref[...].astype(compute_dtype)  # (1, D): broadcasts over sublanes
        o_ref[...] = (jax.nn.sigmoid(x) * w).astype(o_ref.dtype)

    return pl.pallas_call(
        kernel,
        out_shape=jax.ShapeDtypeStruct((B, D), x2d.dtype),
        grid_spec=pl.GridSpec(
            grid=(n_steps,),
            in_specs=[
                _stream_spec(tile_b, D, buffers),
                pl.BlockSpec((1, D), lambda i: (0, 0)),  # weight: VMEM-resident
            ],
            out_specs=_stream_spec(tile_b, D, buffers),
        ),
        compiler_params=pltpu.CompilerParams(
            dimension_semantics=("parallel",),   # independent batch tiles
            vmem_limit_bytes=vmem_limit_bytes,
        ),
        cost_estimate=pl.CostEstimate(
            flops=B * D,
            transcendentals=B * D,
            bytes_accessed=2 * B * D * itemsize + D * jnp.dtype(w2d.dtype).itemsize,
        ),
    )(x2d, w2d)


def eddi_enhancement(x: jax.Array, eddi_weight: jax.Array,
                     *, vmem_limit_bytes: int = 16 * 1024 * 1024) -> jax.Array:
    """sigmoid(x) * eddi_weight, weight broadcast over all leading dims of x."""
    D = eddi_weight.shape[0]
    assert x.shape[-1] == D, "last dim of x must match eddi_weight"
    orig_shape = x.shape
    compute_dtype = _compute_dtype_for(x.dtype)
    x2d = x.reshape(-1, D)
    B = x2d.shape[0]
    itemsize = jnp.dtype(x2d.dtype).itemsize
    sublane = _SUBLANE_BY_ITEMSIZE.get(itemsize, 8)

    if D % _LANES == 0:
        # Already lane-dense.
        w2d = eddi_weight.reshape(1, D)
        tile_b = _choose_tile_b(B, D, itemsize,
                                vmem_limit_bytes=vmem_limit_bytes, sublane=sublane)
        out = _eddi_call(x2d, w2d, tile_b, compute_dtype=compute_dtype,
                         vmem_limit_bytes=vmem_limit_bytes)
        return out.reshape(orig_shape)

    if _LANES % D == 0:
        # Lane-dense repack: present a 128-wide lane axis, tile the weight.
        rep = _LANES // D
        pad_rows = (-B) % rep
        xp = x2d if pad_rows == 0 else jnp.pad(x2d, ((0, pad_rows), (0, 0)))
        xp = xp.reshape(-1, _LANES)
        w2d = jnp.tile(eddi_weight, rep).reshape(1, _LANES)
        Bp = xp.shape[0]
        tile_b = _choose_tile_b(Bp, _LANES, itemsize,
                                vmem_limit_bytes=vmem_limit_bytes, sublane=sublane)
        out = _eddi_call(xp, w2d, tile_b, compute_dtype=compute_dtype,
                         vmem_limit_bytes=vmem_limit_bytes)
        return out.reshape(-1, D)[:B].reshape(orig_shape)

    # General D (neither multiple nor divisor of 128): zero-pad features to the
    # next multiple of 128 so every store is unmasked, then slice the pad off.
    Dp = -(-D // _LANES) * _LANES
    xp = jnp.pad(x2d, ((0, 0), (0, Dp - D)))
    wp = jnp.pad(eddi_weight, (0, Dp - D)).reshape(1, Dp)
    tile_b = _choose_tile_b(B, Dp, itemsize,
                            vmem_limit_bytes=vmem_limit_bytes, sublane=sublane)
    out = _eddi_call(xp, wp, tile_b, compute_dtype=compute_dtype,
                     vmem_limit_bytes=vmem_limit_bytes)
    return out[:, :D].reshape(orig_shape)

    # TODO(synk): at production scale, prefer fusing sigmoid(x)*w as an epilogue
    # into the producer kernel; a standalone mem-bound pass cannot beat that.


if __name__ == "__main__":
    key = jax.random.PRNGKey(0)
    k1, k2, k3, k4 = jax.random.split(key, 4)

    # Case 1: the module's natural small shape (D=32 < 128 -> lane-dense repack path).
    x1 = jax.random.normal(k1, (8, 32), dtype=jnp.float32)
    w1 = jnp.ones((32,), dtype=jnp.float32)
    o1 = jax.block_until_ready(eddi_enhancement(x1, w1))
    r1 = jax.nn.sigmoid(x1) * w1[None, :]
    assert o1.shape == x1.shape
    assert jnp.allclose(o1, r1, atol=1e-6), "mismatch (lane repack path)"

    # Case 2: lane-aligned D (multiple of 128) -> direct path, single block.
    x2 = jax.random.normal(k2, (16, 256), dtype=jnp.float32)
    w2 = jax.random.normal(k3, (256,), dtype=jnp.float32)
    o2 = jax.block_until_ready(eddi_enhancement(x2, w2))
    r2 = jax.nn.sigmoid(x2) * w2[None, :]
    assert jnp.allclose(o2, r2, atol=1e-5), "mismatch (direct path)"

    # Case 3: small VMEM limit forces a multi-step grid (exercises Buffered(3),
    # VMEM accounting, and a partial tail block).
    x3 = jax.random.normal(k3, (4096, 256), dtype=jnp.float32)
    w3 = jax.random.normal(k4, (256,), dtype=jnp.float32)
    o3 = jax.block_until_ready(
        eddi_enhancement(x3, w3, vmem_limit_bytes=2 * 1024 * 1024))
    r3 = jax.nn.sigmoid(x3) * w3[None, :]
    assert jnp.allclose(o3, r3, atol=1e-5), "mismatch (tiled/pipelined path)"

    # Case 4: bf16 input (bf16 compute on v6e/v7x, f32 on v5e), odd batch -> row pad.
    x4 = jax.random.normal(k4, (7, 32), dtype=jnp.float32).astype(jnp.bfloat16)
    w4 = jnp.ones((32,), dtype=jnp.float32)
    o4 = jax.block_until_ready(eddi_enhancement(x4, w4))
    r4 = jax.nn.sigmoid(x4.astype(jnp.float32)) * w4[None, :]
    assert o4.shape == x4.shape
    assert jnp.allclose(o4.astype(jnp.float32), r4, atol=2e-2), "mismatch (bf16 path)"

    # Case 5: D neither multiple nor divisor of 128 -> feature-pad path.
    x5 = jax.random.normal(k1, (8, 48), dtype=jnp.float32)
    w5 = jax.random.normal(k2, (48,), dtype=jnp.float32)
    o5 = jax.block_until_ready(eddi_enhancement(x5, w5))
    r5 = jax.nn.sigmoid(x5) * w5[None, :]
    assert jnp.allclose(o5, r5, atol=1e-5), "mismatch (feature-pad path)"

    print("KERNEL_OK")
</pallas_src>

<mosaic_0001>
module attributes {stable_mosaic.version = 11 : i64} {
  func.func @kernel(%arg0: i32, %arg1: memref<2x128xf32, #tpu.memory_space<vmem>>, %arg2: memref<1x128xf32, #tpu.memory_space<vmem>>, %arg3: memref<2x128xf32, #tpu.memory_space<vmem>>) attributes {dimension_semantics = [#tpu.dimension_semantics<parallel>], iteration_bounds = array<i64: 1>, scalar_prefetch = 0 : i64, scratch_operands = 0 : i64, tpu.core_type = #tpu.core_type<tc>, window_params = [{transform_indices = @transform_0, window_bounds = array<i64: 2, 128>}, {pipeline_mode = #tpu.pipeline_mode<synchronous>, transform_indices = @transform_1, window_bounds = array<i64: 1, 128>}, {transform_indices = @transform_2, window_bounds = array<i64: 2, 128>}]} {
    %c0 = arith.constant 0 : index
    %c0_0 = arith.constant 0 : index
    %0 = vector.load %arg1[%c0, %c0_0] : memref<2x128xf32, #tpu.memory_space<vmem>>, vector<2x128xf32>
    %c0_1 = arith.constant 0 : index
    %c0_2 = arith.constant 0 : index
    %1 = vector.load %arg2[%c0_1, %c0_2] : memref<1x128xf32, #tpu.memory_space<vmem>>, vector<1x128xf32>
    %2 = arith.negf %0 : vector<2x128xf32>
    %3 = math.exp %2 : vector<2x128xf32>
    %cst = arith.constant 1.000000e+00 : f32
    %4 = vector.broadcast %cst : f32 to vector<2x128xf32>
    %5 = arith.addf %4, %3 : vector<2x128xf32>
    %6 = arith.divf %4, %5 : vector<2x128xf32>
    %7 = vector.broadcast %1 : vector<1x128xf32> to vector<2x128xf32>
    %8 = arith.mulf %6, %7 : vector<2x128xf32>
    %c0_3 = arith.constant 0 : index
    %c0_4 = arith.constant 0 : index
    %9 = vector.load %arg3[%c0_3, %c0_4] : memref<2x128xf32, #tpu.memory_space<vmem>>, vector<2x128xf32>
    tpu.vector_store %arg3[%c0_3, %c0_4], %8 {strides = array<i32>} : memref<2x128xf32, #tpu.memory_space<vmem>>, vector<2x128xf32>,
    return
  }
  func.func @transform_0(%arg0: i32) -> (i32, i32) {
    %c0_i32 = arith.constant 0 : i32
    %c0_i32_0 = arith.constant 0 : i32
    return %arg0, %c0_i32 : i32, i32
  }
  func.func @transform_1(%arg0: i32) -> (i32, i32) {
    %c0_i32 = arith.constant 0 : i32
    %c0_i32_0 = arith.constant 0 : i32
    %c0_i32_1 = arith.constant 0 : i32
    return %c0_i32, %c0_i32_0 : i32, i32
  }
  func.func @transform_2(%arg0: i32) -> (i32, i32) {
    %c0_i32 = arith.constant 0 : i32
    %c0_i32_0 = arith.constant 0 : i32
    return %arg0, %c0_i32 : i32, i32
  }
}

</mosaic_0001>

<llo_original>
// kernel: tpu_custom_call.1
$region0: #{tpu_custom_call.1}
  #allocation0 [shape = 'u32[]', space=smem, size = 0x4, offset = 0x4, fixed_abs, tag = 'smem constant byte address 0x4 - core index']
  #allocation1 [shape = 'u32[72,128]{1,0:T(1,128)}', space=vmem, size = 0x9000, scoped, tag = 'internal scratch']
  %s0 = inlined_call_operand.hbm [shape: f32[2,128], index: 0, kind: input, shape index: {}]
  %s1 = inlined_call_operand.hbm [shape: f32[1,128], index: 1, kind: input, shape index: {}]
  %s2 = inlined_call_operand.hbm [shape: f32[2,128], index: 2, kind: output, shape index: {}]
  %s3 = sld [smem:[#allocation0]]
  $region26: #{tpu_custom_call.1} parent=0
    _
  %s5 = ssub.s32 1, %s3
  %s6 = scalar_select 0, %s5, %s3
  $region1: #{tpu_custom_call.1} parent=0
    #allocation2 [shape = 'u8[1024]{0}', space=vmem, size = 0x400, scoped, tag = 'input window, operand 0, single buffered']
    #allocation3 [shape = 's32[1]{0}', space=sflag, size = 0x4, scoped, tag = 'scoped memory for tpu_custom_call.1']
    #allocation4 [shape = 's32[1]{0}', space=sflag, size = 0x4, scoped, tag = 'scoped memory for tpu_custom_call.1']
    #allocation5 [shape = 'u8[512]{0}', space=vmem, size = 0x400, scoped, tag = 'input window, operand 1, single buffered']
    #allocation6 [shape = 's32[1]{0}', space=sflag, size = 0x4, scoped, tag = 'scoped memory for tpu_custom_call.1']
    #allocation7 [shape = 'u8[1024]{0}', space=vmem, size = 0x400, scoped, tag = 'output window, operand 0, single buffered']
    %7 = vsyncpa [#allocation3], 0
    %8 = vsyncpa [#allocation6], 0
    %9 = vsyncpa [#allocation4], 0
    // Predicated region
    $region2: #{tpu_custom_call.1} parent=1 // pred_check
      _
    $region3: #{tpu_custom_call.1} parent=1 // pred_check_branch
      %11 = sbr.rel (0) target = $region5
    $region4: #{tpu_custom_call.1} parent=1 // pred_region
      %13 = vsyncadd [#allocation3], 0
      %s15 = sshll.u32 %s0, 4
      %s16 = int_to_ptr.hbm [resolvable:$true] %s15
      %s17 = sshll.u32 [#allocation2], 4
      %s18 = int_to_ptr.vmem [resolvable:$true] %s17
      %20 = dma.hbm_to_vmem [thread:$0]  %s16, 32, %s18, [#allocation3]
    $region5: #{tpu_custom_call.1} parent=1 // pred_fallthru
      _
    // Predicated region
    $region6: #{tpu_custom_call.1} parent=1 // pred_check
      _
    $region7: #{tpu_custom_call.1} parent=1 // pred_check_branch
      %22 = sbr.rel (0) target = $region9
    $region8: #{tpu_custom_call.1} parent=1 // pred_region
      %24 = vsyncadd [#allocation6], 0
      %s26 = sshll.u32 %s1, 4
      %s27 = int_to_ptr.hbm [resolvable:$true] %s26
      %s28 = sshll.u32 [#allocation5], 4
      %s29 = int_to_ptr.vmem [resolvable:$true] %s28
      %31 = dma.hbm_to_vmem [thread:$0]  %s27, 16, %s29, [#allocation6]
    $region9: #{tpu_custom_call.1} parent=1 // pred_fallthru
      _
    // Predicated region
    $region10: #{tpu_custom_call.1} parent=1 // pred_check
      _
    $region11: #{tpu_custom_call.1} parent=1 // pred_check_branch
      %33 = sbr.rel (0) target = $region13
    $region12: #{tpu_custom_call.1} parent=1 // pred_region
      %35 = dma.done [#allocation3], 32
    $region13: #{tpu_custom_call.1} parent=1 // pred_fallthru
      _
    // Predicated region
    $region14: #{tpu_custom_call.1} parent=1 // pred_check
      _
    $region15: #{tpu_custom_call.1} parent=1 // pred_check_branch
      %37 = sbr.rel (0) target = $region17
    $region16: #{tpu_custom_call.1} parent=1 // pred_region
      %39 = dma.done [#allocation6], 16
    $region17: #{tpu_custom_call.1} parent=1 // pred_fallthru
      _
    %v40 = vld [vmem:[#allocation2] sm:$0x3]
    %v41 = vld [vmem:[#allocation5] sm:$0x1]
    %v42 = vxor.u32 %v40, 2147483648
    %v43 = vmul.f32 %v42, 1.442695
    %v44 = vpow.pop %v43
    %v45 = vadd.f32 %v44, 1.0
    %v46 = vrcp.pop %v45
    %v47 = vmul.f32 %v45, %v46
    %v48 = vsub.f32 1.0, %v47
    %v49 = vmul.f32 %v46, %v48
    %v50 = vadd.f32 %v46, %v49
    %vm51 = vweird.f32 %v45
    %vm52 = vweird.f32 %v46
    %vm53 = vmor %vm51, %vm52
    %v54 = vsel %vm53, %v46, %v50
    %v55 = vand.u32 2147483647, %v45
    %vm56 = vcmp.eq.f32.partialorder %v55, 8.507059e+37
    %v57 = vand.u32 %v45, 2147483648
    %v58 = vor.u32 1.1754944e-38, %v57
    %v59 = vsel %vm56, %v58, %v54
    %v60 = vmul.f32 1.0, %v59
    %v62 = vperm.slane %v41, 0
    %v64 = vmul.f32 %v60, %v62
    %65 = vst [vmem:[#allocation7] sm:$0x3] %v64
    // Predicated region
    $region18: #{tpu_custom_call.1} parent=1 // pred_check
      _
    $region19: #{tpu_custom_call.1} parent=1 // pred_check_branch
      %67 = sbr.rel (0) target = $region21
    $region20: #{tpu_custom_call.1} parent=1 // pred_region
      %69 = vsyncadd [#allocation4], 0
      %s71 = sshll.u32 [#allocation7], 4
      %s72 = int_to_ptr.vmem [resolvable:$true] %s71
      %s73 = sshll.u32 %s2, 4
      %s74 = int_to_ptr.hbm [resolvable:$true] %s73
      %76 = dma.vmem_to_hbm [thread:$0]  %s72, 32, %s74, [#allocation4]
    $region21: #{tpu_custom_call.1} parent=1 // pred_fallthru
      _
    // Predicated region
    $region22: #{tpu_custom_call.1} parent=1 // pred_check
      _
    $region23: #{tpu_custom_call.1} parent=1 // pred_check_branch
      %78 = sbr.rel (0) target = $region25
    $region24: #{tpu_custom_call.1} parent=1 // pred_region
      %80 = dma.done [#allocation4], 32
    $region25: #{tpu_custom_call.1} parent=1 // pred_fallthru
      _
    %81 = vsyncpa [#allocation3], 1
    %82 = vsyncpa [#allocation6], 1
    %83 = vsyncpa [#allocation4], 1

</llo_original>
